<compile_context>
chip_gen: v7x
topology: tpu7x:2x2x1
jax: 0.10.0
libtpu: 0.0.40
codegen_flags: <defaults>
</compile_context>

<pallas_src>
import math
import numpy as np
import jax
import jax.numpy as jnp
from jax.experimental import pallas as pl
from jax.experimental.pallas import tpu as pltpu


# ---- synthetic symmetry group: cyclic group Z_G ------------------------------
class CyclicGroup:
    def __init__(self, size):
        self.size = size
        # index2inverse_indices[g][h] = index of g^{-1} * h = (h - g) mod G
        self.index2inverse_indices = [
            np.array([(h - g) % size for h in range(size)], dtype=np.int32)
            for g in range(size)
        ]


def _round_up(x, m):
    return (x + m - 1) // m * m


def _pick_tm(batch):
    """M tile: multiple of 16 (bf16 sublane pack).  Large enough for MXU
    efficiency, chosen to keep batch-padding waste low (perf-review item)."""
    if batch <= 512:
        return _round_up(batch, 16)            # single M tile, minimal padding
    for cand in (512, 256, 128):
        b_pad = _round_up(batch, cand)
        if (b_pad - batch) / b_pad <= 0.15:    # <= 15% dead MXU rows / writeback
            return cand
    return 128                                 # minimum-waste fallback


# ---- Pallas kernel ------------------------------------------------------------
def _group_conv_kernel(perm_ref, x_ref, w_ref, b_ref, o_ref):
    # perm_ref : (G, G) int32   SMEM (scalar prefetch)  perm[g, h] = inverse-index table
    # x_ref    : (G, tm, I)     VMEM  activations (group axis leading, lane-dense (tm, I))
    # w_ref    : (G, I, E)      VMEM  raw weights, resident (constant index_map -> one HBM read)
    # b_ref    : (1, E)  f32    VMEM  bias
    # o_ref    : (1, tm, E) f32 VMEM  output block for this (m-tile, g); written once
    g = pl.program_id(1)
    G = w_ref.shape[0]
    tm = x_ref.shape[1]
    E = w_ref.shape[2]

    acc = jnp.zeros((tm, E), jnp.float32)
    # Short static unroll over the group reduction axis h (G is a small
    # compile-time constant).  Each step gathers the permuted weight slab from
    # the resident weights (dynamic first-axis index) and feeds the MXU;
    # accumulation stays f32 in vregs -- no scratch, no revisited output.
    for h in range(G):
        w_h = w_ref[perm_ref[g, h]]            # (I, E) in-kernel gather
        acc = acc + jnp.dot(x_ref[h], w_h, preferred_element_type=jnp.float32)

    # Single lane-contiguous store with the bias fused in.
    o_ref[0] = (acc + b_ref[...]).astype(o_ref.dtype)


# ---- wrapper -------------------------------------------------------------------
def group_conv(x, weights, bias, group, *, compute_dtype=jnp.bfloat16):
    """out[b, g, e] = sum_{h,i} x[b, h, i] * weights[perm[g, h], i, e] + bias[e]."""
    B, G, I = x.shape
    Gw, Iw, E = weights.shape
    assert (Gw, Iw) == (G, I), (weights.shape, x.shape)

    # Inverse-index table -> SMEM via scalar prefetch (drives the in-kernel gather).
    perm = jnp.asarray(
        np.stack([np.asarray(group.index2inverse_indices[g]) for g in range(G)]),
        dtype=jnp.int32,
    )  # (G, G)

    tm = _pick_tm(B)
    B_pad = _round_up(B, tm)

    # Layout plumbing only (one fused XLA pass; no G x filter blow-up anymore):
    # x: (B, G, I) -> (G, B_pad, I) so each kernel block keeps (sublane, lane) =
    # (tm, I) dense and x_ref[h] is a cheap static leading-axis index.
    x_t = jnp.transpose(x, (1, 0, 2)).astype(compute_dtype)
    if B_pad != B:
        x_t = jnp.pad(x_t, ((0, 0), (0, B_pad - B), (0, 0)))
    w = weights.astype(compute_dtype)                 # (G, I, E): read from HBM once
    bias2 = bias.astype(jnp.float32).reshape(1, E)

    grid = (B_pad // tm, G)                           # (M tiles, output group)

    # VMEM budget estimate (double-buffered inputs + output) with headroom.
    itemsize = jnp.dtype(compute_dtype).itemsize
    est = 2 * (G * tm * I * itemsize + G * I * E * itemsize + tm * E * 4 + E * 4)
    vmem_limit = int(min(max(est + (4 << 20), 32 << 20), 100 << 20))

    out_t = pl.pallas_call(
        _group_conv_kernel,
        out_shape=jax.ShapeDtypeStruct((G, B_pad, E), jnp.float32),
        grid_spec=pltpu.PrefetchScalarGridSpec(
            num_scalar_prefetch=1,                    # perm -> SMEM
            grid=grid,
            in_specs=[
                # activations: index constant across g -> DMA'd once per M tile
                pl.BlockSpec((G, tm, I), lambda i, g, p: (0, i, 0)),
                # raw weights: constant index -> DMA'd from HBM exactly once, VMEM-resident
                pl.BlockSpec((G, I, E), lambda i, g, p: (0, 0, 0)),
                # bias
                pl.BlockSpec((1, E), lambda i, g, p: (0, 0)),
            ],
            out_specs=pl.BlockSpec((1, tm, E), lambda i, g, p: (g, i, 0)),
        ),
        compiler_params=pltpu.CompilerParams(
            # Each (m-tile, g) writes a disjoint output block -> both axes parallel;
            # the g axis keeps the v7x second TensorCore busy even at tiny batch.
            dimension_semantics=("parallel", "parallel"),
            vmem_limit_bytes=vmem_limit,
        ),
    )(perm, x_t, w, bias2)

    return jnp.transpose(out_t, (1, 0, 2))[:B]        # (B, G, E)


if __name__ == "__main__":
    # small shapes consistent with the module
    G, I, E, B = 4, 16, 32, 2
    group = CyclicGroup(G)

    key = jax.random.PRNGKey(0)
    k_w, k_x = jax.random.split(key)

    # deterministic parameter init (mirrors _init_parameters / __init__)
    stdv = 1.0 / math.sqrt(E)
    weights = jax.random.uniform(k_w, (G, I, E), jnp.float32, minval=-stdv, maxval=stdv)
    bias = 0.1 * jnp.ones((E,), jnp.float32)

    x = jax.random.normal(k_x, (B, G, I), jnp.float32)

    out = jax.block_until_ready(group_conv(x, weights, bias, group))

    # pure-JAX f32 reference of the PyTorch forward
    idx = jnp.asarray(
        np.stack([np.asarray(group.index2inverse_indices[g]) for g in range(G)])
    )                                                  # (G, G)
    filt = weights[idx]                                # (G, G, I, E)
    ref = jnp.einsum("bhi,ghie->bge", x, filt) + bias  # (B, G, E)

    assert out.shape == (B, G, E), out.shape
    # bf16 MXU operands (f32 accumulation) -> loosened tolerance vs the f32 reference.
    np.testing.assert_allclose(np.asarray(out), np.asarray(ref), rtol=5e-2, atol=5e-2)
    print("KERNEL_OK")
</pallas_src>

<mosaic_0001>
module attributes {stable_mosaic.version = 11 : i64} {
  func.func @_group_conv_kernel(%arg0: i32, %arg1: i32, %arg2: memref<4x4xi32, #tpu.memory_space<smem>>, %arg3: memref<4x16x16xbf16, #tpu.memory_space<vmem>>, %arg4: memref<4x16x32xbf16, #tpu.memory_space<vmem>>, %arg5: memref<1x32xf32, #tpu.memory_space<vmem>>, %arg6: memref<1x16x32xf32, #tpu.memory_space<vmem>>) attributes {dimension_semantics = [#tpu.dimension_semantics<parallel>, #tpu.dimension_semantics<parallel>], iteration_bounds = array<i64: 1, 4>, scalar_prefetch = 1 : i64, scratch_operands = 0 : i64, tpu.core_type = #tpu.core_type<tc>, window_params = [{transform_indices = @transform_0, window_bounds = array<i64: 4, 16, 16>}, {pipeline_mode = #tpu.pipeline_mode<synchronous>, transform_indices = @transform_1, window_bounds = array<i64: 4, 16, 32>}, {pipeline_mode = #tpu.pipeline_mode<synchronous>, transform_indices = @transform_2, window_bounds = array<i64: 1, 32>}, {transform_indices = @transform_3, window_bounds = array<i64: 1, 16, 32>}]} {
    %cst = arith.constant 0.000000e+00 : f32
    %0 = vector.broadcast %cst : f32 to vector<16x32xf32>
    %1 = arith.index_cast %arg1 : i32 to index
    %c0 = arith.constant 0 : index
    %2 = memref.load %arg2[%1, %c0] : memref<4x4xi32, #tpu.memory_space<smem>>
    %3 = arith.index_cast %2 : i32 to index
    %c0_0 = arith.constant 0 : index
    %c0_1 = arith.constant 0 : index
    %4 = vector.load %arg4[%3, %c0_0, %c0_1] : memref<4x16x32xbf16, #tpu.memory_space<vmem>>, vector<1x16x32xbf16>
    %5 = vector.shape_cast %4 : vector<1x16x32xbf16> to vector<16x32xbf16>
    %c0_2 = arith.constant 0 : index
    %c0_3 = arith.constant 0 : index
    %c0_4 = arith.constant 0 : index
    %6 = vector.load %arg3[%c0_2, %c0_3, %c0_4] : memref<4x16x16xbf16, #tpu.memory_space<vmem>>, vector<1x16x16xbf16>
    %7 = vector.shape_cast %6 : vector<1x16x16xbf16> to vector<16x16xbf16>
    %cst_5 = arith.constant dense<0.000000e+00> : vector<16x32xf32>
    %8 = tpu.matmul %7, %5, %cst_5 {dimension_numbers = #tpu.dot_dimension_numbers<[1], [0], [0], [1], [0, 0, 1, 1], [], []>} : vector<16x16xbf16>, vector<16x32xbf16>, vector<16x32xf32> -> vector<16x32xf32>
    %9 = arith.addf %0, %8 : vector<16x32xf32>
    %10 = arith.index_cast %arg1 : i32 to index
    %c1 = arith.constant 1 : index
    %11 = memref.load %arg2[%10, %c1] : memref<4x4xi32, #tpu.memory_space<smem>>
    %12 = arith.index_cast %11 : i32 to index
    %c0_6 = arith.constant 0 : index
    %c0_7 = arith.constant 0 : index
    %13 = vector.load %arg4[%12, %c0_6, %c0_7] : memref<4x16x32xbf16, #tpu.memory_space<vmem>>, vector<1x16x32xbf16>
    %14 = vector.shape_cast %13 : vector<1x16x32xbf16> to vector<16x32xbf16>
    %c1_8 = arith.constant 1 : index
    %c0_9 = arith.constant 0 : index
    %c0_10 = arith.constant 0 : index
    %15 = vector.load %arg3[%c1_8, %c0_9, %c0_10] : memref<4x16x16xbf16, #tpu.memory_space<vmem>>, vector<1x16x16xbf16>
    %16 = vector.shape_cast %15 : vector<1x16x16xbf16> to vector<16x16xbf16>
    %cst_11 = arith.constant dense<0.000000e+00> : vector<16x32xf32>
    %17 = tpu.matmul %16, %14, %cst_11 {dimension_numbers = #tpu.dot_dimension_numbers<[1], [0], [0], [1], [0, 0, 1, 1], [], []>} : vector<16x16xbf16>, vector<16x32xbf16>, vector<16x32xf32> -> vector<16x32xf32>
    %18 = arith.addf %9, %17 : vector<16x32xf32>
    %19 = arith.index_cast %arg1 : i32 to index
    %c2 = arith.constant 2 : index
    %20 = memref.load %arg2[%19, %c2] : memref<4x4xi32, #tpu.memory_space<smem>>
    %21 = arith.index_cast %20 : i32 to index
    %c0_12 = arith.constant 0 : index
    %c0_13 = arith.constant 0 : index
    %22 = vector.load %arg4[%21, %c0_12, %c0_13] : memref<4x16x32xbf16, #tpu.memory_space<vmem>>, vector<1x16x32xbf16>
    %23 = vector.shape_cast %22 : vector<1x16x32xbf16> to vector<16x32xbf16>
    %c2_14 = arith.constant 2 : index
    %c0_15 = arith.constant 0 : index
    %c0_16 = arith.constant 0 : index
    %24 = vector.load %arg3[%c2_14, %c0_15, %c0_16] : memref<4x16x16xbf16, #tpu.memory_space<vmem>>, vector<1x16x16xbf16>
    %25 = vector.shape_cast %24 : vector<1x16x16xbf16> to vector<16x16xbf16>
    %cst_17 = arith.constant dense<0.000000e+00> : vector<16x32xf32>
    %26 = tpu.matmul %25, %23, %cst_17 {dimension_numbers = #tpu.dot_dimension_numbers<[1], [0], [0], [1], [0, 0, 1, 1], [], []>} : vector<16x16xbf16>, vector<16x32xbf16>, vector<16x32xf32> -> vector<16x32xf32>
    %27 = arith.addf %18, %26 : vector<16x32xf32>
    %28 = arith.index_cast %arg1 : i32 to index
    %c3 = arith.constant 3 : index
    %29 = memref.load %arg2[%28, %c3] : memref<4x4xi32, #tpu.memory_space<smem>>
    %30 = arith.index_cast %29 : i32 to index
    %c0_18 = arith.constant 0 : index
    %c0_19 = arith.constant 0 : index
    %31 = vector.load %arg4[%30, %c0_18, %c0_19] : memref<4x16x32xbf16, #tpu.memory_space<vmem>>, vector<1x16x32xbf16>
    %32 = vector.shape_cast %31 : vector<1x16x32xbf16> to vector<16x32xbf16>
    %c3_20 = arith.constant 3 : index
    %c0_21 = arith.constant 0 : index
    %c0_22 = arith.constant 0 : index
    %33 = vector.load %arg3[%c3_20, %c0_21, %c0_22] : memref<4x16x16xbf16, #tpu.memory_space<vmem>>, vector<1x16x16xbf16>
    %34 = vector.shape_cast %33 : vector<1x16x16xbf16> to vector<16x16xbf16>
    %cst_23 = arith.constant dense<0.000000e+00> : vector<16x32xf32>
    %35 = tpu.matmul %34, %32, %cst_23 {dimension_numbers = #tpu.dot_dimension_numbers<[1], [0], [0], [1], [0, 0, 1, 1], [], []>} : vector<16x16xbf16>, vector<16x32xbf16>, vector<16x32xf32> -> vector<16x32xf32>
    %36 = arith.addf %27, %35 : vector<16x32xf32>
    %c0_24 = arith.constant 0 : index
    %c0_25 = arith.constant 0 : index
    %37 = vector.load %arg5[%c0_24, %c0_25] : memref<1x32xf32, #tpu.memory_space<vmem>>, vector<1x32xf32>
    %38 = vector.broadcast %37 : vector<1x32xf32> to vector<16x32xf32>
    %39 = arith.addf %36, %38 : vector<16x32xf32>
    %c0_26 = arith.constant 0 : index
    %c0_27 = arith.constant 0 : index
    %c0_28 = arith.constant 0 : index
    %40 = vector.load %arg6[%c0_26, %c0_27, %c0_28] : memref<1x16x32xf32, #tpu.memory_space<vmem>>, vector<1x16x32xf32>
    %41 = vector.shape_cast %40 : vector<1x16x32xf32> to vector<16x32xf32>
    %42 = vector.shape_cast %39 : vector<16x32xf32> to vector<1x16x32xf32>
    tpu.vector_store %arg6[%c0_26, %c0_27, %c0_28], %42 {strides = array<i32>} : memref<1x16x32xf32, #tpu.memory_space<vmem>>, vector<1x16x32xf32>,
    return
  }
  func.func @transform_0(%arg0: i32, %arg1: i32, %arg2: memref<4x4xi32, #tpu.memory_space<smem>>) -> (i32, i32, i32) {
    %c0_i32 = arith.constant 0 : i32
    %c0_i32_0 = arith.constant 0 : i32
    %c0_i32_1 = arith.constant 0 : i32
    return %c0_i32, %arg0, %c0_i32_0 : i32, i32, i32
  }
  func.func @transform_1(%arg0: i32, %arg1: i32, %arg2: memref<4x4xi32, #tpu.memory_space<smem>>) -> (i32, i32, i32) {
    %c0_i32 = arith.constant 0 : i32
    %c0_i32_0 = arith.constant 0 : i32
    %c0_i32_1 = arith.constant 0 : i32
    %c0_i32_2 = arith.constant 0 : i32
    return %c0_i32, %c0_i32_0, %c0_i32_1 : i32, i32, i32
  }
  func.func @transform_2(%arg0: i32, %arg1: i32, %arg2: memref<4x4xi32, #tpu.memory_space<smem>>) -> (i32, i32) {
    %c0_i32 = arith.constant 0 : i32
    %c0_i32_0 = arith.constant 0 : i32
    %c0_i32_1 = arith.constant 0 : i32
    return %c0_i32, %c0_i32_0 : i32, i32
  }
  func.func @transform_3(%arg0: i32, %arg1: i32, %arg2: memref<4x4xi32, #tpu.memory_space<smem>>) -> (i32, i32, i32) {
    %c0_i32 = arith.constant 0 : i32
    %c0_i32_0 = arith.constant 0 : i32
    return %arg1, %arg0, %c0_i32 : i32, i32, i32
  }
}

</mosaic_0001>

<llo_original>
// kernel: tpu_custom_call.1
$region0: #{tpu_custom_call.1}
  #allocation0 [shape = 'u32[]', space=smem, size = 0x4, offset = 0x4, fixed_abs, tag = 'smem constant byte address 0x4 - core index']
  #allocation1 [shape = 'u32[144,128]{1,0:T(1,128)}', space=vmem, size = 0x12000, scoped, tag = 'internal scratch']
  #allocation2 [shape = 's32[1]{0}', space=sflag, size = 0x4, scoped, tag = 'scoped memory for tpu_custom_call.1']
  #allocation3 [shape = 'u8[2048]{0}', space=smem, size = 0x800, scoped, tag = 'prefetched SMEM operand 0']
  %s0 = inlined_call_operand.hbm [shape: s32[4,4], index: 0, kind: input, shape index: {}]
  %s1 = inlined_call_operand.hbm [shape: bf16[4,16,16], index: 1, kind: input, shape index: {}]
  %s2 = inlined_call_operand.hbm [shape: bf16[4,16,32], index: 2, kind: input, shape index: {}]
  %s3 = inlined_call_operand.vmem [shape: f32[1,32], index: 3, kind: input, shape index: {}]
  %s4 = inlined_call_operand.hbm [shape: f32[4,16,32], index: 4, kind: output, shape index: {}]
  %s5 = sld [smem:[#allocation0]]
  $region53: #{tpu_custom_call.1} parent=0
    _
  %s7 = ssub.s32 1, %s5
  %s8 = scalar_select 0, %s7, %s5
  %10 = dma.hbm_to_smem %s0, 64, [#allocation3], [#allocation2]
  %11 = dma.done [#allocation2], 64
  %12 = sfence
  $region1: #{tpu_custom_call.1} parent=0
    #allocation4 [shape = 'u8[16384]{0}', space=vmem, size = 0x4000, scoped, tag = 'input window, operand 1, single buffered']
    #allocation5 [shape = 's32[2]{0}', space=sflag, size = 0x8, scoped, tag = 'scoped memory for tpu_custom_call.1']
    #allocation6 [shape = 's32[2]{0}', space=sflag, size = 0x8, scoped, tag = 'scoped memory for tpu_custom_call.1']
    #allocation7 [shape = 'u8[16384]{0}', space=vmem, size = 0x4000, scoped, tag = 'input window, operand 2, single buffered']
    #allocation8 [shape = 's32[1]{0}', space=sflag, size = 0x4, scoped, tag = 'scoped memory for tpu_custom_call.1']
    #allocation9 [shape = 'u8[16384]{0}', space=vmem, size = 0x4000, scoped, tag = 'output window, operand 0']
    %13 = vsyncpa [#allocation5], 0
    %14 = vsyncpa [#allocation8], 0
    %15 = vsyncpa [#allocation6], 0
    %s16 = scalar_lea.sflag [#allocation6], 1
    %17 = vsyncpa %s16, 0
    loop: start=0, step=1, limit=6
    $region2: #{tpu_custom_call.1} parent=1 // loop_pre_header
      _
    $region3: #{tpu_custom_call.1} parent=1 // loop_header
      %s19 = sphi 0, %s23
      %p20 = scmp.ge.s32.totalorder %s19, 6
      %s26 = sphi 0, %s38
      %s27 = sphi 0, %s34
      %s28 = sphi 0, %s26
      %s29 = sphi 0, %s27
      %s30 = sphi 0, %s28
      %s31 = sphi 0, %s29
      %s41 = sphi 0, %s43
      %s44 = sphi 0, %s41
      %s45 = sphi 0, %s44
      %s61 = sphi 0, %s45
      %s65 = sphi 0, %s65
      %s67 = sphi 0, %s65
      %s68 = sphi 0, %s67
      %s82 = sphi 0, %s68
      %s86 = sphi 0, %s86
      %s88 = sphi 0, %s86
      %s89 = sphi 0, %s88
      %s103 = sphi 0, %s89
      %s111 = sphi 0, %s113
      %s114 = sphi 0, %s111
      %s115 = sphi 0, %s114
      %s131 = sphi 0, %s115
    $region4: #{tpu_custom_call.1} parent=1 // loop_header_branch
      %22 = sbr.rel (%p20) target = $region8
    $region5: #{tpu_custom_call.1} parent=1 // loop_body
      %s24 = ssub.s32 %s19, 1
      %s25 = ssub.s32 %s19, 2
      %s32 = sadd.s32 1, %s27
      %p33 = scmp.ge.s32.totalorder %s32, 4
      %s34 = scalar_select %p33, 0, %s32
      %s35 = sadd.s32 1, %s26
      %s36 = scalar_select %p33, %s35, %s26
      %p37 = scmp.ge.s32.totalorder %s36, 1
      %s38 = scalar_select %p37, 0, %s36
      %s39 = ssub.s32 %s26, %s38
      %p40 = scmp.eq.s32.totalorder %s39, 0
      %s42 = sadd.s32 %s41, 1
      %s43 = scalar_select %p40, %s41, %s42
      %p46 = pneg %p40
      %p47 = scmp.eq.s32.totalorder %s19, 3
      %p48 = por %p46, %p47
      %p49 = scmp.ne.s32.totalorder %s41, %s44
      %p50 = scmp.eq.s32.totalorder %s19, 0
      %p51 = por %p49, %p50
      %p52 = scmp.ne.s32.totalorder %s41, %s44
      %p53 = scmp.eq.s32.totalorder %s24, 3
      %p54 = por %p52, %p53
      %p55 = scmp.ne.s32.totalorder %s44, %s45
      %p56 = scmp.eq.s32.totalorder %s24, 0
      %p57 = por %p55, %p56
      %p58 = scmp.ne.s32.totalorder %s44, %s45
      %p59 = scmp.eq.s32.totalorder %s25, 3
      %p60 = por %p58, %p59
      %p62 = scmp.ne.s32.totalorder %s45, %s61
      %p63 = scmp.eq.s32.totalorder %s25, 0
      %p64 = por %p62, %p63
      %s66 = sadd.s32 %s65, 1
      %p69 = scmp.eq.s32.totalorder %s19, 3
      %p70 = scmp.ne.s32.totalorder %s65, %s67
      %p71 = scmp.eq.s32.totalorder %s19, 0
      %p72 = por %p70, %p71
      %p73 = scmp.ne.s32.totalorder %s65, %s67
      %p74 = scmp.eq.s32.totalorder %s24, 3
      %p75 = por %p73, %p74
      %p76 = scmp.ne.s32.totalorder %s67, %s68
      %p77 = scmp.eq.s32.totalorder %s24, 0
      %p78 = por %p76, %p77
      %p79 = scmp.ne.s32.totalorder %s67, %s68
      %p80 = scmp.eq.s32.totalorder %s25, 3
      %p81 = por %p79, %p80
      %p83 = scmp.ne.s32.totalorder %s68, %s82
      %p84 = scmp.eq.s32.totalorder %s25, 0
      %p85 = por %p83, %p84
      %s87 = sadd.s32 %s86, 1
      %p90 = scmp.eq.s32.totalorder %s19, 3
      %p91 = scmp.ne.s32.totalorder %s86, %s88
      %p92 = scmp.eq.s32.totalorder %s19, 0
      %p93 = por %p91, %p92
      %p94 = scmp.ne.s32.totalorder %s86, %s88
      %p95 = scmp.eq.s32.totalorder %s24, 3
      %p96 = por %p94, %p95
      %p97 = scmp.ne.s32.totalorder %s88, %s89
      %p98 = scmp.eq.s32.totalorder %s24, 0
      %p99 = por %p97, %p98
      %p100 = scmp.ne.s32.totalorder %s88, %s89
      %p101 = scmp.eq.s32.totalorder %s25, 3
      %p102 = por %p100, %p101
      %p104 = scmp.ne.s32.totalorder %s89, %s103
      %p105 = scmp.eq.s32.totalorder %s25, 0
      %p106 = por %p104, %p105
      %s107 = ssub.s32 %s27, %s34
      %s108 = ssub.s32 %s26, %s38
      %s109 = sor.u32 %s107, %s108
      %p110 = scmp.eq.s32.totalorder %s109, 0
      %s112 = sadd.s32 %s111, 1
      %s113 = scalar_select %p110, %s111, %s112
      %p116 = pneg %p110
      %p117 = scmp.eq.s32.totalorder %s19, 3
      %p118 = por %p116, %p117
      %p119 = scmp.ne.s32.totalorder %s111, %s114
      %p120 = scmp.eq.s32.totalorder %s19, 0
      %p121 = por %p119, %p120
      %p122 = scmp.ne.s32.totalorder %s111, %s114
      %p123 = scmp.eq.s32.totalorder %s24, 3
      %p124 = por %p122, %p123
      %p125 = scmp.ne.s32.totalorder %s114, %s115
      %p126 = scmp.eq.s32.totalorder %s24, 0
      %p127 = por %p125, %p126
      %p128 = scmp.ne.s32.totalorder %s114, %s115
      %p129 = scmp.eq.s32.totalorder %s25, 3
      %p130 = por %p128, %p129
      %p132 = scmp.ne.s32.totalorder %s115, %s131
      %p133 = scmp.eq.s32.totalorder %s25, 0
      %p134 = por %p132, %p133
      %p135 = scmp.le.s32.totalorder 1, %s19
      %p136 = scmp.lt.s32.totalorder %s19, 5
      %p137 = pnand %p135, %p136
      %p138 = pneg %p137
      // Predicated region
      $region9: #{tpu_custom_call.1} parent=5 // pred_check
        _
      $region10: #{tpu_custom_call.1} parent=5 // pred_check_branch
        %140 = sbr.rel (%p137) target = $region12
      $region11: #{tpu_custom_call.1} parent=5 // pred_region
        %s141 = ssub.s32 %s19, 1
        // Predicated region
        $region13: #{tpu_custom_call.1} parent=11 // pred_check
          %p142 = pneg %p57
        $region14: #{tpu_custom_call.1} parent=11 // pred_check_branch
          %144 = sbr.rel (%p142) target = $region16
        $region15: #{tpu_custom_call.1} parent=11 // pred_region
          %s145 = smul.u32 2, %s28
          %s147 = ssub.s32 512, 512
          %148 = vsyncadd [#allocation5], %s147
          %s149 = smul.addr %s145, 64
          %s150 = scalar_lea.hbm %s1, %s149
          %s151 = sshll.u32 [#allocation4], 4
          %s152 = int_to_ptr.vmem [resolvable:$true] %s151
          %157 = dma.hbm_to_vmem [thread:$0]  %s150, 512, %s152, [#allocation5], 64, 64, 4
        $region16: #{tpu_custom_call.1} parent=11 // pred_fallthru
          _
        // Predicated region
        $region17: #{tpu_custom_call.1} parent=11 // pred_check
          %p158 = pneg %p78
        $region18: #{tpu_custom_call.1} parent=11 // pred_check_branch
          %160 = sbr.rel (%p158) target = $region20
        $region19: #{tpu_custom_call.1} parent=11 // pred_region
          %s162 = ssub.s32 512, 512
          %163 = vsyncadd [#allocation8], %s162
          %s164 = sshll.u32 [#allocation7], 4
          %s165 = int_to_ptr.vmem [resolvable:$true] %s164
          %170 = dma.hbm_to_vmem [thread:$0]  %s2, 512, %s165, [#allocation8], 64, 64, 4
        $region20: #{tpu_custom_call.1} parent=11 // pred_fallthru
          _
        // Predicated region
        $region21: #{tpu_custom_call.1} parent=11 // pred_check
          %p171 = pneg %p99
        $region22: #{tpu_custom_call.1} parent=11 // pred_check_branch
          %173 = sbr.rel (%p171) target = $region24
        $region23: #{tpu_custom_call.1} parent=11 // pred_region
          _
        $region24: #{tpu_custom_call.1} parent=11 // pred_fallthru
          _
      $region12: #{tpu_custom_call.1} parent=5 // pred_fallthru
        _
      %p174 = scmp.lt.s32.totalorder %s19, 4
      // Predicated region
      $region25: #{tpu_custom_call.1} parent=5 // pred_check
        %p175 = pneg %p174
      $region26: #{tpu_custom_call.1} parent=5 // pred_check_branch
        %177 = sbr.rel (%p175) target = $region28
      $region27: #{tpu_custom_call.1} parent=5 // pred_region
        _
      $region28: #{tpu_custom_call.1} parent=5 // pred_fallthru
        _
      %p178 = scmp.le.s32.totalorder 1, %s19
      %p179 = scmp.lt.s32.totalorder %s19, 5
      %p180 = pnand %p178, %p179
      %p181 = pneg %p180
      // Predicated region
      $region29: #{tpu_custom_call.1} parent=5 // pred_check
        _
      $region30: #{tpu_custom_call.1} parent=5 // pred_check_branch
        %183 = sbr.rel (%p180) target = $region32
      $region31: #{tpu_custom_call.1} parent=5 // pred_region
        %s184 = ssub.s32 %s19, 1
        // Predicated region
        $region33: #{tpu_custom_call.1} parent=31 // pred_check
          %p185 = pneg %p57
        $region34: #{tpu_custom_call.1} parent=31 // pred_check_branch
          %187 = sbr.rel (%p185) target = $region36
        $region35: #{tpu_custom_call.1} parent=31 // pred_region
          %188 = dma.done [#allocation5], 512
        $region36: #{tpu_custom_call.1} parent=31 // pred_fallthru
          _
        // Predicated region
        $region37: #{tpu_custom_call.1} parent=31 // pred_check
          %p189 = pneg %p78
        $region38: #{tpu_custom_call.1} parent=31 // pred_check_branch
          %191 = sbr.rel (%p189) target = $region40
        $region39: #{tpu_custom_call.1} parent=31 // pred_region
          %192 = dma.done [#allocation8], 512
        $region40: #{tpu_custom_call.1} parent=31 // pred_fallthru
          _
        %p193 = pneg %p57
        %p194 = pneg %p54
        %p195 = pneg %p78
        %p196 = pneg %p75
        %p197 = pneg %p99
        %p198 = pneg %p96
        %p199 = pneg %p127
        %p200 = pneg %p124
        %s201 = sand.u32 %s114, 1
        %s202 = scalar_lea.sflag [#allocation6], %s201
        %s203 = sand.u32 %s114, 1
        %s204 = smul.addr %s203, 16
        %s205 = scalar_lea.vmem [#allocation9], %s204
        %s206 = smul.u32 2, %s28
        %s207 = smul.u32 2, %s28
        %s209 = smul.u32 %s29, 128
        %s210 = sld [smem:[#allocation3 + %s209]]
        %s211 = smul.u32 %s210, 2
        %s212 = smul.addr %s211, 4
        %s213 = scalar_lea.vmem [#allocation7], %s212
        %v214 = vld [vmem:[%s213] sm:$0xf]
        %v215 = vld [vmem:[%s213 + $0x4] sm:$0xf]
        %v216 = vld [vmem:[#allocation4] sm:$0xf]
        %v217 = vld [vmem:[#allocation4 + $0x4] sm:$0xf]
        %s218 = sadd.s32 %s209, 1
        %s219 = sld [smem:[#allocation3 + %s218]]
        %s220 = smul.u32 %s219, 2
        %s221 = smul.addr %s220, 4
        %s222 = scalar_lea.vmem [#allocation7], %s221
        %v223 = vld [vmem:[%s222] sm:$0xf]
        %v224 = vld [vmem:[%s222 + $0x4] sm:$0xf]
        %s225 = scalar_lea.vmem [#allocation4], 8
        %v226 = vld [vmem:[%s225] sm:$0xf]
        %v227 = vld [vmem:[%s225 + $0x4] sm:$0xf]
        %v230 = vunpack.c.l.b16 %v226
        %v231 = vunpack.c.l.b16 %v227
        %v232 = vpack.c.b16 %v231, %v230
        %v235 = vunpack.c.l.b16 %v223
        %v236 = vunpack.c.l.b16 %v224
        %v237 = vpack.c.b16 %v236, %v235
        %vm239 = vcmask 130048
        %v241 = vsel %vm239, %v232, 0
        %243 = vmatprep.subr.bf16.mxu0 0
        %244 = vmatpush1.bf16.msra.mxu0 %v237
        %245 = vmatprep.subr.bf16.mxu0 0
        %246 = vmatpush1.bf16.msra.mxu0 0
        %247 = vmatprep.subr.bf16.mxu0 0
        %248 = vmatpush1.bf16.msra.mxu0 0
        %249 = vmatprep.subr.bf16.mxu0 0
        %250 = vmatpush1.bf16.msra.mxu0 0
        %251 = vmatprep.subr.bf16.mxu0 0
        %252 = vmatpush1.bf16.msra.mxu0 0
        %253 = vmatprep.subr.bf16.mxu0 0
        %254 = vmatpush1.bf16.msra.mxu0 0
        %255 = vmatprep.subr.bf16.mxu0 0
        %256 = vmatpush1.bf16.msra.mxu0 0
        %257 = vmatprep.subr.bf16.mxu0 0
        %258 = vmatpush1.bf16.msra.mxu0 0
        %259 = vmatprep.subr.bf16.mxu0 0
        %260 = vmatpush1.bf16.msra.mxu0 0
        %261 = vmatprep.subr.bf16.mxu0 0
        %262 = vmatpush1.bf16.msra.mxu0 0
        %263 = vmatprep.subr.bf16.mxu0 0
        %264 = vmatpush1.bf16.msra.mxu0 0
        %265 = vmatprep.subr.bf16.mxu0 0
        %266 = vmatpush1.bf16.msra.mxu0 0
        %267 = vmatprep.subr.bf16.mxu0 0
        %268 = vmatpush1.bf16.msra.mxu0 0
        %269 = vmatprep.subr.bf16.mxu0 0
        %270 = vmatpush1.bf16.msra.mxu0 0
        %271 = vmatprep.subr.bf16.mxu0 0
        %272 = vmatpush1.bf16.msra.mxu0 0
        %273 = vmatprep.subr.bf16.mxu0 0
        %274 = vmatpush1.bf16.msra.mxu0 0
        %275 = vmatprep.mubr.bf16.mxu0 0
        %276 = vmatmul.mubr.bf16.gmra.mrb[0].mxu0 %v241
        %v277 = vpop.f32.mrb[0].mxu0
        %v278 = vadd.f32 0.0, %v277
        %v279 = vpop.f32.mrb[0].mxu0
        %v280 = vpop.f32.mrb[0].mxu0
        %v281 = vadd.f32 0.0, %v280
        %v282 = vpop.f32.mrb[0].mxu0
        %283 = vdwg.mxu0
        %v286 = vunpack.c.l.b16 %v216
        %v287 = vunpack.c.l.b16 %v217
        %v288 = vpack.c.b16 %v287, %v286
        %v291 = vunpack.c.l.b16 %v214
        %v292 = vunpack.c.l.b16 %v215
        %v293 = vpack.c.b16 %v292, %v291
        %v296 = vsel %vm239, %v288, 0
        %298 = vmatprep.subr.bf16.mxu0 0
        %299 = vmatpush1.bf16.msra.mxu0 %v293
        %300 = vmatprep.subr.bf16.mxu0 0
        %301 = vmatpush1.bf16.msra.mxu0 0
        %302 = vmatprep.subr.bf16.mxu0 0
        %303 = vmatpush1.bf16.msra.mxu0 0
        %304 = vmatprep.subr.bf16.mxu0 0
        %305 = vmatpush1.bf16.msra.mxu0 0
        %306 = vmatprep.subr.bf16.mxu0 0
        %307 = vmatpush1.bf16.msra.mxu0 0
        %308 = vmatprep.subr.bf16.mxu0 0
        %309 = vmatpush1.bf16.msra.mxu0 0
        %310 = vmatprep.subr.bf16.mxu0 0
        %311 = vmatpush1.bf16.msra.mxu0 0
        %312 = vmatprep.subr.bf16.mxu0 0
        %313 = vmatpush1.bf16.msra.mxu0 0
        %314 = vmatprep.subr.bf16.mxu0 0
        %315 = vmatpush1.bf16.msra.mxu0 0
        %316 = vmatprep.subr.bf16.mxu0 0
        %317 = vmatpush1.bf16.msra.mxu0 0
        %318 = vmatprep.subr.bf16.mxu0 0
        %319 = vmatpush1.bf16.msra.mxu0 0
        %320 = vmatprep.subr.bf16.mxu0 0
        %321 = vmatpush1.bf16.msra.mxu0 0
        %322 = vmatprep.subr.bf16.mxu0 0
        %323 = vmatpush1.bf16.msra.mxu0 0
        %324 = vmatprep.subr.bf16.mxu0 0
        %325 = vmatpush1.bf16.msra.mxu0 0
        %326 = vmatprep.subr.bf16.mxu0 0
        %327 = vmatpush1.bf16.msra.mxu0 0
        %328 = vmatprep.subr.bf16.mxu0 0
        %329 = vmatpush1.bf16.msra.mxu0 0
        %330 = vmatprep.mubr.bf16.mxu0 0
        %331 = vmatmul.mubr.bf16.gmra.mrb[0].mxu0 %v296
        %v332 = vpop.f32.mrb[0].mxu0
        %v333 = vadd.f32 %v278, %v332
        %v334 = vpop.f32.mrb[0].mxu0
        %v335 = vpop.f32.mrb[0].mxu0
        %v336 = vadd.f32 %v281, %v335
        %v337 = vpop.f32.mrb[0].mxu0
        %338 = vdwg.mxu0
        %s339 = sadd.s32 %s209, 2
        %s340 = sld [smem:[#allocation3 + %s339]]
        %s341 = smul.u32 %s340, 2
        %s342 = smul.addr %s341, 4
        %s343 = scalar_lea.vmem [#allocation7], %s342
        %v344 = vld [vmem:[%s343] sm:$0xf]
        %v345 = vld [vmem:[%s343 + $0x4] sm:$0xf]
        %s346 = scalar_lea.vmem [#allocation4], 16
        %v347 = vld [vmem:[%s346] sm:$0xf]
        %v348 = vld [vmem:[%s346 + $0x4] sm:$0xf]
        %v351 = vunpack.c.l.b16 %v347
        %v352 = vunpack.c.l.b16 %v348
        %v353 = vpack.c.b16 %v352, %v351
        %v356 = vunpack.c.l.b16 %v344
        %v357 = vunpack.c.l.b16 %v345
        %v358 = vpack.c.b16 %v357, %v356
        %v361 = vsel %vm239, %v353, 0
        %363 = vmatprep.subr.bf16.mxu0 0
        %364 = vmatpush1.bf16.msra.mxu0 %v358
        %365 = vmatprep.subr.bf16.mxu0 0
        %366 = vmatpush1.bf16.msra.mxu0 0
        %367 = vmatprep.subr.bf16.mxu0 0
        %368 = vmatpush1.bf16.msra.mxu0 0
        %369 = vmatprep.subr.bf16.mxu0 0
        %370 = vmatpush1.bf16.msra.mxu0 0
        %371 = vmatprep.subr.bf16.mxu0 0
        %372 = vmatpush1.bf16.msra.mxu0 0
        %373 = vmatprep.subr.bf16.mxu0 0
        %374 = vmatpush1.bf16.msra.mxu0 0
        %375 = vmatprep.subr.bf16.mxu0 0
        %376 = vmatpush1.bf16.msra.mxu0 0
        %377 = vmatprep.subr.bf16.mxu0 0
        %378 = vmatpush1.bf16.msra.mxu0 0
        %379 = vmatprep.subr.bf16.mxu0 0
        %380 = vmatpush1.bf16.msra.mxu0 0
        %381 = vmatprep.subr.bf16.mxu0 0
        %382 = vmatpush1.bf16.msra.mxu0 0
        %383 = vmatprep.subr.bf16.mxu0 0
        %384 = vmatpush1.bf16.msra.mxu0 0
        %385 = vmatprep.subr.bf16.mxu0 0
        %386 = vmatpush1.bf16.msra.mxu0 0
        %387 = vmatprep.subr.bf16.mxu0 0
        %388 = vmatpush1.bf16.msra.mxu0 0
        %389 = vmatprep.subr.bf16.mxu0 0
        %390 = vmatpush1.bf16.msra.mxu0 0
        %391 = vmatprep.subr.bf16.mxu0 0
        %392 = vmatpush1.bf16.msra.mxu0 0
        %393 = vmatprep.subr.bf16.mxu0 0
        %394 = vmatpush1.bf16.msra.mxu0 0
        %395 = vmatprep.mubr.bf16.mxu0 0
        %396 = vmatmul.mubr.bf16.gmra.mrb[0].mxu0 %v361
        %v397 = vpop.f32.mrb[0].mxu0
        %v398 = vadd.f32 0.0, %v397
        %v399 = vpop.f32.mrb[0].mxu0
        %v400 = vpop.f32.mrb[0].mxu0
        %v401 = vadd.f32 0.0, %v400
        %v402 = vpop.f32.mrb[0].mxu0
        %403 = vdwg.mxu0
        %v404 = vadd.f32 %v333, %v398
        %v405 = vadd.f32 %v336, %v401
        %s406 = sadd.s32 %s209, 3
        %s407 = sld [smem:[#allocation3 + %s406]]
        %s408 = smul.u32 %s407, 2
        %s409 = smul.addr %s408, 4
        %s410 = scalar_lea.vmem [#allocation7], %s409
        %v411 = vld [vmem:[%s410] sm:$0xf]
        %v412 = vld [vmem:[%s410 + $0x4] sm:$0xf]
        %s413 = scalar_lea.vmem [#allocation4], 24
        %v414 = vld [vmem:[%s413] sm:$0xf]
        %v415 = vld [vmem:[%s413 + $0x4] sm:$0xf]
        %v418 = vunpack.c.l.b16 %v414
        %v419 = vunpack.c.l.b16 %v415
        %v420 = vpack.c.b16 %v419, %v418
        %v423 = vunpack.c.l.b16 %v411
        %v424 = vunpack.c.l.b16 %v412
        %v425 = vpack.c.b16 %v424, %v423
        %v428 = vsel %vm239, %v420, 0
        %430 = vmatprep.subr.bf16.mxu0 0
        %431 = vmatpush1.bf16.msra.mxu0 %v425
        %432 = vmatprep.subr.bf16.mxu0 0
        %433 = vmatpush1.bf16.msra.mxu0 0
        %434 = vmatprep.subr.bf16.mxu0 0
        %435 = vmatpush1.bf16.msra.mxu0 0
        %436 = vmatprep.subr.bf16.mxu0 0
        %437 = vmatpush1.bf16.msra.mxu0 0
        %438 = vmatprep.subr.bf16.mxu0 0
        %439 = vmatpush1.bf16.msra.mxu0 0
        %440 = vmatprep.subr.bf16.mxu0 0
        %441 = vmatpush1.bf16.msra.mxu0 0
        %442 = vmatprep.subr.bf16.mxu0 0
        %443 = vmatpush1.bf16.msra.mxu0 0
        %444 = vmatprep.subr.bf16.mxu0 0
        %445 = vmatpush1.bf16.msra.mxu0 0
        %446 = vmatprep.subr.bf16.mxu0 0
        %447 = vmatpush1.bf16.msra.mxu0 0
        %448 = vmatprep.subr.bf16.mxu0 0
        %449 = vmatpush1.bf16.msra.mxu0 0
        %450 = vmatprep.subr.bf16.mxu0 0
        %451 = vmatpush1.bf16.msra.mxu0 0
        %452 = vmatprep.subr.bf16.mxu0 0
        %453 = vmatpush1.bf16.msra.mxu0 0
        %454 = vmatprep.subr.bf16.mxu0 0
        %455 = vmatpush1.bf16.msra.mxu0 0
        %456 = vmatprep.subr.bf16.mxu0 0
        %457 = vmatpush1.bf16.msra.mxu0 0
        %458 = vmatprep.subr.bf16.mxu0 0
        %459 = vmatpush1.bf16.msra.mxu0 0
        %460 = vmatprep.subr.bf16.mxu0 0
        %461 = vmatpush1.bf16.msra.mxu0 0
        %462 = vmatprep.mubr.bf16.mxu0 0
        %463 = vmatmul.mubr.bf16.gmra.mrb[0].mxu0 %v428
        %v464 = vpop.f32.mrb[0].mxu0
        %v465 = vadd.f32 0.0, %v464
        %v466 = vpop.f32.mrb[0].mxu0
        %v467 = vpop.f32.mrb[0].mxu0
        %v468 = vadd.f32 0.0, %v467
        %v469 = vpop.f32.mrb[0].mxu0
        %470 = vdwg.mxu0
        %v471 = vadd.f32 %v404, %v465
        %v472 = vadd.f32 %v405, %v468
        %v473 = vld [vmem:[%s3] sm:$0x1]
        %v475 = vlaneseq
        %v476 = vshrl.u32 %v475, 7
        %v477 = vsub.s32 0, %v476
        %v478 = vrot.slane %v473, %v477
        %v480 = vadd.f32 %v471, %v478
        %v481 = vadd.f32 %v472, %v478
        %vm482 = vcmask 261120
        %483 = vst.msk [vmem:[%s205] sm:$0xff] %vm482, %v480
        %484 = vst.msk [vmem:[%s205 + $0x8] sm:$0xff] %vm482, %v481
        %s485 = sand.u32 %s114, 1
        %s486 = scalar_lea.sflag [#allocation6], %s485
        %s487 = sand.u32 %s114, 1
        %s488 = smul.addr %s487, 16
        %s489 = scalar_lea.vmem [#allocation9], %s488
        // Predicated region
        $region41: #{tpu_custom_call.1} parent=31 // pred_check
          %p490 = pneg %p124
        $region42: #{tpu_custom_call.1} parent=31 // pred_check_branch
          %492 = sbr.rel (%p490) target = $region44
        $region43: #{tpu_custom_call.1} parent=31 // pred_region
          %s493 = smul.u32 2, %s28
          %s495 = ssub.s32 256, 256
          %496 = vsyncadd %s486, %s495
          %s497 = smul.addr %s29, 2
          %s498 = sadd.s32 %s493, %s497
          %s499 = smul.addr %s498, 128
          %s500 = scalar_lea.hbm %s4, %s499
          %s501 = sshll.u32 %s489, 4
          %s502 = int_to_ptr.vmem [resolvable:$true] %s501
          %507 = dma.vmem_to_hbm [thread:$0]  %s502, 256, %s500, %s486, 128, 128, 8
        $region44: #{tpu_custom_call.1} parent=31 // pred_fallthru
          _
      $region32: #{tpu_custom_call.1} parent=5 // pred_fallthru
        _
      %p508 = scmp.le.s32.totalorder 2, %s19
      // Predicated region
      $region45: #{tpu_custom_call.1} parent=5 // pred_check
        %p509 = pneg %p508
      $region46: #{tpu_custom_call.1} parent=5 // pred_check_branch
        %511 = sbr.rel (%p509) target = $region48
      $region47: #{tpu_custom_call.1} parent=5 // pred_region
        %s512 = ssub.s32 %s19, 2
        // Predicated region
        $region49: #{tpu_custom_call.1} parent=47 // pred_check
          %p513 = pneg %p130
        $region50: #{tpu_custom_call.1} parent=47 // pred_check_branch
          %515 = sbr.rel (%p513) target = $region52
        $region51: #{tpu_custom_call.1} parent=47 // pred_region
          %s516 = sand.u32 %s115, 1
          %s517 = scalar_lea.sflag [#allocation6], %s516
          %s518 = sand.u32 %s115, 1
          %s519 = smul.addr %s518, 16
          %s520 = scalar_lea.vmem [#allocation9], %s519
          %521 = dma.done %s517, 256
        $region52: #{tpu_custom_call.1} parent=47 // pred_fallthru
          _
      $region48: #{tpu_custom_call.1} parent=5 // pred_fallthru
        _
    $region6: #{tpu_custom_call.1} parent=1 // loop_footer
      %s23 = sadd.s32 1, %s19
    $region7: #{tpu_custom_call.1} parent=1 // loop_footer_branch
      %18 = sbr.rel target = $region3
    $region8: #{tpu_custom_call.1} parent=1 // loop_exit
      _
    %522 = vsyncpa [#allocation5], 1
    %s523 = scalar_lea.sflag [#allocation5], 1
    %524 = vsyncpa %s523, 1
    %525 = vsyncpa [#allocation8], 1
    %526 = vsyncpa [#allocation6], 1
    %s527 = scalar_lea.sflag [#allocation6], 1
    %528 = vsyncpa %s527, 1

</llo_original>
